<compile_context>
chip_gen: v7x
topology: tpu7x:2x2x1
jax: 0.10.0
libtpu: 0.0.40
codegen_flags: <defaults>
</compile_context>

<pallas_src>
import functools

import jax
import jax.numpy as jnp
from jax.experimental import pallas as pl
from jax.experimental.pallas import tpu as pltpu


def _spec_augment_kernel(x_starts_ref, y_starts_ref, x_ref, out_ref,
                         *, x_width, y_width, n_x, n_y, batch_tile):
    """Masks one (batch_tile, TT, F) block of the (B, T, F) input."""
    bi = pl.program_id(0)            # batch-block index
    ti = pl.program_id(1)            # time-block index
    _, tt, f = x_ref.shape

    # Global time index of every sublane row in this tile; freq index of every
    # lane.  Hoisted out of the per-batch loop (broadcasts are not CSE'd).
    row_idx = jax.lax.broadcasted_iota(jnp.int32, (tt, 1), 0) + ti * tt
    col_idx = jax.lax.broadcasted_iota(jnp.int32, (1, f), 1)

    for bb in range(batch_tile):                 # static, small unroll
        b = bi * batch_tile + bb                 # global batch index (scalar)

        # Time-stripe mask (per sublane): OR over the tiny static region count.
        t_masked = jnp.zeros((tt, 1), dtype=jnp.bool_)
        for r in range(n_x):
            s = x_starts_ref[b * n_x + r]
            t_masked = t_masked | ((row_idx >= s) & (row_idx < s + x_width))

        # Freq-stripe mask (per lane).
        f_masked = jnp.zeros((1, f), dtype=jnp.bool_)
        for r in range(n_y):
            s = y_starts_ref[b * n_y + r]
            f_masked = f_masked | ((col_idx >= s) & (col_idx < s + y_width))

        tile = x_ref[bb]
        out_ref[bb] = jnp.where(t_masked | f_masked,
                                jnp.zeros_like(tile), tile)


def _choose_tiles(b, t, row_bytes, sub_min, target_bytes):
    """Pick (batch_tile, time_tile) by a byte budget (mem-bound streaming)."""
    divisors = [d for d in range(1, t + 1) if t % d == 0]
    valid = [d for d in divisors if d % sub_min == 0] or [t]
    fitting = [d for d in valid if d * row_bytes <= target_bytes]
    tt = max(fitting) if fitting else min(valid)

    # If a full-T slab is still small, block several batch elements per step,
    # but keep the unroll small and leave grid steps for megacore sharding.
    bb = 1
    if tt == t:
        slab = max(1, tt * row_bytes)
        limit = max(1, min(b, target_bytes // slab, 8, max(1, b // 8)))
        for cand in range(int(limit), 0, -1):
            if b % cand == 0:
                bb = cand
                break
    return bb, tt


def spec_augment(x, x_starts, y_starts, *, cutout_x_width, cutout_y_width,
                 time_tile=None, batch_tile=None, target_block_bytes=4 << 20):
    """Pallas-backed SpecAugment.

    x:        (B, T, F) float array.
    x_starts: (B, cutout_x_regions) int32 time-stripe left edges.
    y_starts: (B, cutout_y_regions) int32 freq-stripe left edges.
    """
    b, t, f = x.shape
    x_width = int(cutout_x_width)
    y_width = int(cutout_y_width)

    # Degenerate configs (no regions on an axis): dummy start + width 0 so the
    # kernel keeps a single static shape and the stripe never fires.
    if x_starts.shape[1] == 0:
        x_starts = jnp.zeros((b, 1), jnp.int32)
        x_width = 0
    if y_starts.shape[1] == 0:
        y_starts = jnp.zeros((b, 1), jnp.int32)
        y_width = 0
    n_x = x_starts.shape[1]
    n_y = y_starts.shape[1]
    # 1-D SMEM tables (2-D scalar-prefetch arrays pad to [ceil(R/8)*8, 128]).
    x_starts = x_starts.astype(jnp.int32).reshape(-1)
    y_starts = y_starts.astype(jnp.int32).reshape(-1)

    # Lane-dense stores: pad F up to a multiple of 128 (typical mel F=64/80
    # would otherwise force masked partial vst on every row).
    itemsize = x.dtype.itemsize
    f_pad = ((f + 127) // 128) * 128
    if f_pad != f:
        x = jnp.pad(x, ((0, 0), (0, 0), (0, f_pad - f)))

    # Byte-budget tiling with a dtype-aware sublane floor.
    sub_min = {4: 8, 2: 16, 1: 32}.get(itemsize, 8)
    row_bytes = f_pad * itemsize
    auto_bb, auto_tt = _choose_tiles(b, t, row_bytes, sub_min,
                                     target_block_bytes)
    tt = auto_tt if time_tile is None else int(time_tile)
    bb = auto_bb if batch_tile is None else int(batch_tile)
    assert t % tt == 0, "time dim must be divisible by time_tile"
    assert b % bb == 0, "batch dim must be divisible by batch_tile"
    grid = (b // bb, t // tt)
    block_bytes = bb * tt * row_bytes

    kernel = functools.partial(
        _spec_augment_kernel, x_width=x_width, y_width=y_width,
        n_x=n_x, n_y=n_y, batch_tile=bb)

    out = pl.pallas_call(
        kernel,
        out_shape=jax.ShapeDtypeStruct((b, t, f_pad), x.dtype),
        grid_spec=pltpu.PrefetchScalarGridSpec(
            num_scalar_prefetch=2,            # x_starts, y_starts -> SMEM
            grid=grid,
            in_specs=[pl.BlockSpec((bb, tt, f_pad),
                                   lambda bi, ti, xs, ys: (bi, ti, 0))],
            out_specs=pl.BlockSpec((bb, tt, f_pad),
                                   lambda bi, ti, xs, ys: (bi, ti, 0)),
        ),
        # x (operand 2, after the two scalar-prefetch args) aliases output 0:
        # in-place when the caller donates x (torch masked_fill semantics).
        input_output_aliases={2: 0},
        compiler_params=pltpu.CompilerParams(
            dimension_semantics=("parallel", "parallel"),
            # in+out double buffering = 4x block bytes; raise past v5e's 16 MiB
            # default scoped limit, stay under v7x's 64 MiB physical VMEM.
            vmem_limit_bytes=int(min(64 << 20,
                                     max(32 << 20,
                                         4 * block_bytes + (8 << 20))))),
        cost_estimate=pl.CostEstimate(
            flops=2 * b * t * f_pad, transcendentals=0,
            bytes_accessed=2 * b * t * f_pad * itemsize),
    )(x_starts, y_starts, x)

    return out[:, :, :f] if f_pad != f else out


def _reference(x, x_starts, y_starts, x_width, y_width):
    """Pure-JAX reference with the same stripe offsets."""
    b, t, f = x.shape
    t_idx = jnp.arange(t)[None, :, None]
    f_idx = jnp.arange(f)[None, None, :]
    t_mask = jnp.zeros((b, t, 1), bool)
    for r in range(x_starts.shape[1]):
        s = x_starts[:, r][:, None, None]
        t_mask = t_mask | ((t_idx >= s) & (t_idx < s + x_width))
    f_mask = jnp.zeros((b, 1, f), bool)
    for r in range(y_starts.shape[1]):
        s = y_starts[:, r][:, None, None]
        f_mask = f_mask | ((f_idx >= s) & (f_idx < s + y_width))
    return jnp.where(t_mask | f_mask, jnp.zeros_like(x), x)


if __name__ == "__main__":
    key = jax.random.PRNGKey(0)

    def run_case(case_key, b, t, f, n_x, n_y, w_x, w_y, **kw):
        k_x, k_xs, k_ys = jax.random.split(case_key, 3)
        x = jax.random.normal(k_x, (b, t, f), dtype=jnp.float32)
        # torch: int(rng.uniform(0, dim - width)) == uniform int in [0, dim-width)
        x_starts = jax.random.randint(k_xs, (b, n_x), 0, max(1, t - w_x),
                                      dtype=jnp.int32)
        y_starts = jax.random.randint(k_ys, (b, n_y), 0, max(1, f - w_y),
                                      dtype=jnp.int32)
        ref = _reference(x, x_starts, y_starts, w_x, w_y)
        out = spec_augment(x, x_starts, y_starts,
                           cutout_x_width=w_x, cutout_y_width=w_y, **kw)
        out = jax.block_until_ready(out)
        assert out.shape == x.shape and out.dtype == x.dtype
        assert bool(jnp.all(out == ref)), f"mismatch for case {(b, t, f)}"

    k1, k2, k3 = jax.random.split(key, 3)
    # (1) explicit time tiling -> grid (2, 4); stripes cross tile boundaries.
    run_case(k1, 2, 64, 128, 2, 2, 10, 10, time_tile=16)
    # (2) auto byte-budget tiling + lane-dense padding path (F=80 -> 128).
    run_case(k2, 2, 32, 80, 2, 1, 8, 10)
    # (3) multi-batch blocks (batch_tile > 1) with full-T slabs.
    run_case(k3, 16, 16, 128, 1, 2, 4, 16, batch_tile=2)

    print("KERNEL_OK")
</pallas_src>

<mosaic_0001>
module attributes {stable_mosaic.version = 11 : i64} {
  func.func @_spec_augment_kernel(%arg0: i32, %arg1: i32, %arg2: memref<4xi32, #tpu.memory_space<smem>>, %arg3: memref<4xi32, #tpu.memory_space<smem>>, %arg4: memref<1x16x128xf32, #tpu.memory_space<vmem>>, %arg5: memref<1x16x128xf32, #tpu.memory_space<vmem>>) attributes {dimension_semantics = [#tpu.dimension_semantics<parallel>, #tpu.dimension_semantics<parallel>], iteration_bounds = array<i64: 2, 4>, scalar_prefetch = 2 : i64, scratch_operands = 0 : i64, tpu.core_type = #tpu.core_type<tc>, window_params = [{transform_indices = @transform_0, window_bounds = array<i64: 1, 16, 128>}, {transform_indices = @transform_1, window_bounds = array<i64: 1, 16, 128>}]} {
    %0 = tpu.iota {dimensions = array<i32: 0>} : vector<16x1xi32>
    %c16_i32 = arith.constant 16 : i32
    %1 = arith.muli %arg1, %c16_i32 : i32
    %2 = vector.broadcast %1 : i32 to vector<16x1xi32>
    %3 = arith.addi %0, %2 : vector<16x1xi32>
    %4 = tpu.iota {dimensions = array<i32: 1>} : vector<1x128xi32>
    %c1_i32 = arith.constant 1 : i32
    %5 = arith.muli %arg0, %c1_i32 : i32
    %c0_i32 = arith.constant 0 : i32
    %6 = arith.addi %5, %c0_i32 : i32
    %false = arith.constant false
    %7 = vector.broadcast %false : i1 to vector<16x1xi1>
    %c2_i32 = arith.constant 2 : i32
    %8 = arith.muli %6, %c2_i32 : i32
    %c0_i32_0 = arith.constant 0 : i32
    %9 = arith.addi %8, %c0_i32_0 : i32
    %10 = arith.index_cast %9 : i32 to index
    %11 = memref.load %arg2[%10] : memref<4xi32, #tpu.memory_space<smem>>
    %12 = vector.broadcast %11 : i32 to vector<16x1xi32>
    %13 = arith.cmpi sge, %3, %12 : vector<16x1xi32>
    %c10_i32 = arith.constant 10 : i32
    %14 = arith.addi %11, %c10_i32 : i32
    %15 = vector.broadcast %14 : i32 to vector<16x1xi32>
    %16 = arith.cmpi slt, %3, %15 : vector<16x1xi32>
    %17 = arith.andi %13, %16 : vector<16x1xi1>
    %18 = arith.ori %7, %17 : vector<16x1xi1>
    %c2_i32_1 = arith.constant 2 : i32
    %19 = arith.muli %6, %c2_i32_1 : i32
    %c1_i32_2 = arith.constant 1 : i32
    %20 = arith.addi %19, %c1_i32_2 : i32
    %21 = arith.index_cast %20 : i32 to index
    %22 = memref.load %arg2[%21] : memref<4xi32, #tpu.memory_space<smem>>
    %23 = vector.broadcast %22 : i32 to vector<16x1xi32>
    %24 = arith.cmpi sge, %3, %23 : vector<16x1xi32>
    %c10_i32_3 = arith.constant 10 : i32
    %25 = arith.addi %22, %c10_i32_3 : i32
    %26 = vector.broadcast %25 : i32 to vector<16x1xi32>
    %27 = arith.cmpi slt, %3, %26 : vector<16x1xi32>
    %28 = arith.andi %24, %27 : vector<16x1xi1>
    %29 = arith.ori %18, %28 : vector<16x1xi1>
    %false_4 = arith.constant false
    %30 = vector.broadcast %false_4 : i1 to vector<1x128xi1>
    %c2_i32_5 = arith.constant 2 : i32
    %31 = arith.muli %6, %c2_i32_5 : i32
    %c0_i32_6 = arith.constant 0 : i32
    %32 = arith.addi %31, %c0_i32_6 : i32
    %33 = arith.index_cast %32 : i32 to index
    %34 = memref.load %arg3[%33] : memref<4xi32, #tpu.memory_space<smem>>
    %35 = vector.broadcast %34 : i32 to vector<1x128xi32>
    %36 = arith.cmpi sge, %4, %35 : vector<1x128xi32>
    %c10_i32_7 = arith.constant 10 : i32
    %37 = arith.addi %34, %c10_i32_7 : i32
    %38 = vector.broadcast %37 : i32 to vector<1x128xi32>
    %39 = arith.cmpi slt, %4, %38 : vector<1x128xi32>
    %40 = arith.andi %36, %39 : vector<1x128xi1>
    %41 = arith.ori %30, %40 : vector<1x128xi1>
    %c2_i32_8 = arith.constant 2 : i32
    %42 = arith.muli %6, %c2_i32_8 : i32
    %c1_i32_9 = arith.constant 1 : i32
    %43 = arith.addi %42, %c1_i32_9 : i32
    %44 = arith.index_cast %43 : i32 to index
    %45 = memref.load %arg3[%44] : memref<4xi32, #tpu.memory_space<smem>>
    %46 = vector.broadcast %45 : i32 to vector<1x128xi32>
    %47 = arith.cmpi sge, %4, %46 : vector<1x128xi32>
    %c10_i32_10 = arith.constant 10 : i32
    %48 = arith.addi %45, %c10_i32_10 : i32
    %49 = vector.broadcast %48 : i32 to vector<1x128xi32>
    %50 = arith.cmpi slt, %4, %49 : vector<1x128xi32>
    %51 = arith.andi %47, %50 : vector<1x128xi1>
    %52 = arith.ori %41, %51 : vector<1x128xi1>
    %c0 = arith.constant 0 : index
    %c0_11 = arith.constant 0 : index
    %c0_12 = arith.constant 0 : index
    %53 = vector.load %arg4[%c0, %c0_11, %c0_12] : memref<1x16x128xf32, #tpu.memory_space<vmem>>, vector<1x16x128xf32>
    %54 = vector.shape_cast %53 : vector<1x16x128xf32> to vector<16x128xf32>
    %55 = vector.broadcast %29 : vector<16x1xi1> to vector<16x128xi1>
    %56 = vector.broadcast %52 : vector<1x128xi1> to vector<16x128xi1>
    %57 = arith.ori %55, %56 : vector<16x128xi1>
    %cst = arith.constant 0.000000e+00 : f32
    %58 = vector.broadcast %cst : f32 to vector<16x128xf32>
    %59 = arith.select %57, %58, %54 : vector<16x128xi1>, vector<16x128xf32>
    %c0_13 = arith.constant 0 : index
    %c0_14 = arith.constant 0 : index
    %c0_15 = arith.constant 0 : index
    %60 = vector.load %arg5[%c0_13, %c0_14, %c0_15] : memref<1x16x128xf32, #tpu.memory_space<vmem>>, vector<1x16x128xf32>
    %61 = vector.shape_cast %60 : vector<1x16x128xf32> to vector<16x128xf32>
    %62 = vector.shape_cast %59 : vector<16x128xf32> to vector<1x16x128xf32>
    tpu.vector_store %arg5[%c0_13, %c0_14, %c0_15], %62 {strides = array<i32>} : memref<1x16x128xf32, #tpu.memory_space<vmem>>, vector<1x16x128xf32>,
    return
  }
  func.func @transform_0(%arg0: i32, %arg1: i32, %arg2: memref<4xi32, #tpu.memory_space<smem>>, %arg3: memref<4xi32, #tpu.memory_space<smem>>) -> (i32, i32, i32) {
    %c0_i32 = arith.constant 0 : i32
    %c0_i32_0 = arith.constant 0 : i32
    return %arg0, %arg1, %c0_i32 : i32, i32, i32
  }
  func.func @transform_1(%arg0: i32, %arg1: i32, %arg2: memref<4xi32, #tpu.memory_space<smem>>, %arg3: memref<4xi32, #tpu.memory_space<smem>>) -> (i32, i32, i32) {
    %c0_i32 = arith.constant 0 : i32
    %c0_i32_0 = arith.constant 0 : i32
    return %arg0, %arg1, %c0_i32 : i32, i32, i32
  }
}

</mosaic_0001>

<llo_original>
// kernel: tpu_custom_call.1
$region0: #{tpu_custom_call.1}
  #allocation0 [shape = 'u32[]', space=smem, size = 0x4, offset = 0x4, fixed_abs, tag = 'smem constant byte address 0x4 - core index']
  #allocation1 [shape = 'u32[144,128]{1,0:T(1,128)}', space=vmem, size = 0x12000, scoped, tag = 'internal scratch']
  #allocation2 [shape = 's32[1]{0}', space=sflag, size = 0x4, scoped, tag = 'scoped memory for tpu_custom_call.1']
  #allocation3 [shape = 'u8[512]{0}', space=smem, size = 0x200, scoped, tag = 'prefetched SMEM operand 0']
  #allocation4 [shape = 'u8[512]{0}', space=smem, size = 0x200, scoped, tag = 'prefetched SMEM operand 1']
  %s0 = inlined_call_operand.vmem [shape: s32[4], index: 0, kind: input, shape index: {}]
  %s1 = inlined_call_operand.vmem [shape: s32[4], index: 1, kind: input, shape index: {}]
  %s2 = inlined_call_operand.hbm [shape: f32[2,64,128], index: 2, kind: input, shape index: {}, may-alias: {2,3}]
  %s3 = inlined_call_operand.hbm [shape: f32[2,64,128], index: 3, kind: output, shape index: {}, may-alias: {2,3}]
  %s4 = sld [smem:[#allocation0]]
  $region41: #{tpu_custom_call.1} parent=0
    _
  %s6 = ssub.s32 1, %s4
  %s7 = scalar_select 0, %s6, %s4
  %s8 = sshll.u32 %s0, 4
  %s9 = int_to_ptr.vmem [resolvable:$true] %s8
  %11 = dma.vmem_to_smem %s9, 16, [#allocation3], [#allocation2]
  %s12 = sshll.u32 %s1, 4
  %s13 = int_to_ptr.vmem [resolvable:$true] %s12
  %15 = dma.vmem_to_smem %s13, 16, [#allocation4], [#allocation2]
  %16 = dma.done [#allocation2], 32
  %17 = sfence
  $region1: #{tpu_custom_call.1} parent=0
    #allocation5 [shape = 'u8[16384]{0}', space=vmem, size = 0x4000, scoped, tag = 'input window, operand 2']
    #allocation6 [shape = 's32[2]{0}', space=sflag, size = 0x8, scoped, tag = 'scoped memory for tpu_custom_call.1']
    #allocation7 [shape = 's32[2]{0}', space=sflag, size = 0x8, scoped, tag = 'scoped memory for tpu_custom_call.1']
    #allocation8 [shape = 'u8[16384]{0}', space=vmem, size = 0x4000, scoped, tag = 'output window, operand 0']
    %18 = vsyncpa [#allocation6], 0
    %s19 = scalar_lea.sflag [#allocation6], 1
    %20 = vsyncpa %s19, 0
    %21 = vsyncpa [#allocation7], 0
    %s22 = scalar_lea.sflag [#allocation7], 1
    %23 = vsyncpa %s22, 0
    loop: start=0, step=1, limit=10
    $region2: #{tpu_custom_call.1} parent=1 // loop_pre_header
      _
    $region3: #{tpu_custom_call.1} parent=1 // loop_header
      %s25 = sphi 0, %s29
      %p26 = scmp.ge.s32.totalorder %s25, 10
      %s32 = sphi 0, %s44
      %s33 = sphi 0, %s40
      %s34 = sphi 0, %s32
      %s35 = sphi 0, %s33
      %s36 = sphi 0, %s34
      %s37 = sphi 0, %s35
      %s49 = sphi 0, %s51
      %s52 = sphi 0, %s49
      %s53 = sphi 0, %s52
      %s69 = sphi 0, %s53
      %s77 = sphi 0, %s79
      %s80 = sphi 0, %s77
      %s81 = sphi 0, %s80
      %s97 = sphi 0, %s81
    $region4: #{tpu_custom_call.1} parent=1 // loop_header_branch
      %28 = sbr.rel (%p26) target = $region8
    $region5: #{tpu_custom_call.1} parent=1 // loop_body
      %s30 = ssub.s32 %s25, 1
      %s31 = ssub.s32 %s25, 2
      %s38 = sadd.s32 1, %s33
      %p39 = scmp.ge.s32.totalorder %s38, 4
      %s40 = scalar_select %p39, 0, %s38
      %s41 = sadd.s32 1, %s32
      %s42 = scalar_select %p39, %s41, %s32
      %p43 = scmp.ge.s32.totalorder %s42, 2
      %s44 = scalar_select %p43, 0, %s42
      %s45 = ssub.s32 %s32, %s44
      %s46 = ssub.s32 %s33, %s40
      %s47 = sor.u32 %s45, %s46
      %p48 = scmp.eq.s32.totalorder %s47, 0
      %s50 = sadd.s32 %s49, 1
      %s51 = scalar_select %p48, %s49, %s50
      %p54 = pneg %p48
      %p55 = scmp.eq.s32.totalorder %s25, 7
      %p56 = por %p54, %p55
      %p57 = scmp.ne.s32.totalorder %s49, %s52
      %p58 = scmp.eq.s32.totalorder %s25, 0
      %p59 = por %p57, %p58
      %p60 = scmp.ne.s32.totalorder %s49, %s52
      %p61 = scmp.eq.s32.totalorder %s30, 7
      %p62 = por %p60, %p61
      %p63 = scmp.ne.s32.totalorder %s52, %s53
      %p64 = scmp.eq.s32.totalorder %s30, 0
      %p65 = por %p63, %p64
      %p66 = scmp.ne.s32.totalorder %s52, %s53
      %p67 = scmp.eq.s32.totalorder %s31, 7
      %p68 = por %p66, %p67
      %p70 = scmp.ne.s32.totalorder %s53, %s69
      %p71 = scmp.eq.s32.totalorder %s31, 0
      %p72 = por %p70, %p71
      %s73 = ssub.s32 %s32, %s44
      %s74 = ssub.s32 %s33, %s40
      %s75 = sor.u32 %s73, %s74
      %p76 = scmp.eq.s32.totalorder %s75, 0
      %s78 = sadd.s32 %s77, 1
      %s79 = scalar_select %p76, %s77, %s78
      %p82 = pneg %p76
      %p83 = scmp.eq.s32.totalorder %s25, 7
      %p84 = por %p82, %p83
      %p85 = scmp.ne.s32.totalorder %s77, %s80
      %p86 = scmp.eq.s32.totalorder %s25, 0
      %p87 = por %p85, %p86
      %p88 = scmp.ne.s32.totalorder %s77, %s80
      %p89 = scmp.eq.s32.totalorder %s30, 7
      %p90 = por %p88, %p89
      %p91 = scmp.ne.s32.totalorder %s80, %s81
      %p92 = scmp.eq.s32.totalorder %s30, 0
      %p93 = por %p91, %p92
      %p94 = scmp.ne.s32.totalorder %s80, %s81
      %p95 = scmp.eq.s32.totalorder %s31, 7
      %p96 = por %p94, %p95
      %p98 = scmp.ne.s32.totalorder %s81, %s97
      %p99 = scmp.eq.s32.totalorder %s31, 0
      %p100 = por %p98, %p99
      %p101 = scmp.le.s32.totalorder 1, %s25
      %p102 = scmp.lt.s32.totalorder %s25, 9
      %p103 = pnand %p101, %p102
      %p104 = pneg %p103
      // Predicated region
      $region9: #{tpu_custom_call.1} parent=5 // pred_check
        _
      $region10: #{tpu_custom_call.1} parent=5 // pred_check_branch
        %106 = sbr.rel (%p103) target = $region12
      $region11: #{tpu_custom_call.1} parent=5 // pred_region
        %s107 = ssub.s32 %s25, 1
      $region12: #{tpu_custom_call.1} parent=5 // pred_fallthru
        _
      %p108 = scmp.lt.s32.totalorder %s25, 8
      // Predicated region
      $region13: #{tpu_custom_call.1} parent=5 // pred_check
        %p109 = pneg %p108
      $region14: #{tpu_custom_call.1} parent=5 // pred_check_branch
        %111 = sbr.rel (%p109) target = $region16
      $region15: #{tpu_custom_call.1} parent=5 // pred_region
        // Predicated region
        $region17: #{tpu_custom_call.1} parent=15 // pred_check
          %p112 = pneg %p59
        $region18: #{tpu_custom_call.1} parent=15 // pred_check_branch
          %114 = sbr.rel (%p112) target = $region20
        $region19: #{tpu_custom_call.1} parent=15 // pred_region
          %s115 = sand.u32 %s49, 1
          %s116 = scalar_lea.sflag [#allocation6], %s115
          %s117 = sand.u32 %s49, 1
          %s118 = smul.addr %s117, 16
          %s119 = scalar_lea.vmem [#allocation5], %s118
          %s120 = smul.u32 2, %s33
          %s122 = ssub.s32 256, 256
          %123 = vsyncadd %s116, %s122
          %s124 = smul.addr %s32, 8
          %s125 = sadd.s32 %s120, %s124
          %s126 = smul.addr %s125, 128
          %s127 = scalar_lea.hbm %s2, %s126
          %s128 = sshll.u32 %s119, 4
          %s129 = int_to_ptr.vmem [resolvable:$true] %s128
          %134 = dma.hbm_to_vmem [thread:$0]  %s127, 256, %s129, %s116, 128, 128, 8
        $region20: #{tpu_custom_call.1} parent=15 // pred_fallthru
          _
      $region16: #{tpu_custom_call.1} parent=5 // pred_fallthru
        _
      %p135 = scmp.le.s32.totalorder 1, %s25
      %p136 = scmp.lt.s32.totalorder %s25, 9
      %p137 = pnand %p135, %p136
      %p138 = pneg %p137
      // Predicated region
      $region21: #{tpu_custom_call.1} parent=5 // pred_check
        _
      $region22: #{tpu_custom_call.1} parent=5 // pred_check_branch
        %140 = sbr.rel (%p137) target = $region24
      $region23: #{tpu_custom_call.1} parent=5 // pred_region
        %s141 = ssub.s32 %s25, 1
        %s142 = sand.u32 %s52, 1
        %s143 = scalar_lea.sflag [#allocation6], %s142
        %s144 = sand.u32 %s52, 1
        %s145 = smul.addr %s144, 16
        %s146 = scalar_lea.vmem [#allocation5], %s145
        // Predicated region
        $region25: #{tpu_custom_call.1} parent=23 // pred_check
          %p147 = pneg %p65
        $region26: #{tpu_custom_call.1} parent=23 // pred_check_branch
          %149 = sbr.rel (%p147) target = $region28
        $region27: #{tpu_custom_call.1} parent=23 // pred_region
          %150 = dma.done %s143, 256
        $region28: #{tpu_custom_call.1} parent=23 // pred_fallthru
          _
        %s151 = sand.u32 %s52, 1
        %s152 = scalar_lea.sflag [#allocation6], %s151
        %s153 = sand.u32 %s52, 1
        %s154 = smul.addr %s153, 16
        %s155 = scalar_lea.vmem [#allocation5], %s154
        %p156 = pneg %p65
        %p157 = pneg %p62
        %p158 = pneg %p93
        %p159 = pneg %p90
        %s160 = sand.u32 %s80, 1
        %s161 = scalar_lea.sflag [#allocation7], %s160
        %s162 = sand.u32 %s80, 1
        %s163 = smul.addr %s162, 16
        %s164 = scalar_lea.vmem [#allocation8], %s163
        %s165 = smul.u32 2, %s35
        %s166 = smul.u32 2, %s35
        %v167 = vlaneseq
        %v168 = vshrl.u32 %v167, 7
        %v169 = vadd.s32 %v168, 8
        %s170 = smul.u32 %s35, 16
        %v171 = vstv %s170
        %v172 = vadd.s32 %v168, %v171
        %v173 = vadd.s32 %v169, %v171
        %v174 = vlaneseq
        %v175 = vand.u32 %v174, 127
        %s176 = smul.u32 %s34, 2
        %s177 = sld [smem:[#allocation3 + %s176]]
        %v178 = vstv %s177
        %vm179 = vcmp.ge.s32.totalorder %v172, %v178
        %vm180 = vcmp.ge.s32.totalorder %v173, %v178
        %s181 = sadd.s32 %s177, 10
        %v182 = vstv %s181
        %vm183 = vcmp.lt.s32.totalorder %v172, %v182
        %vm184 = vcmp.lt.s32.totalorder %v173, %v182
        %vm185 = vmand %vm179, %vm183
        %vm186 = vmand %vm180, %vm184
        %s187 = sadd.s32 %s176, 1
        %s188 = sld [smem:[#allocation3 + %s187]]
        %v189 = vstv %s188
        %vm190 = vcmp.ge.s32.totalorder %v172, %v189
        %vm191 = vcmp.ge.s32.totalorder %v173, %v189
        %s192 = sadd.s32 %s188, 10
        %v193 = vstv %s192
        %vm194 = vcmp.lt.s32.totalorder %v172, %v193
        %vm195 = vcmp.lt.s32.totalorder %v173, %v193
        %vm196 = vmand %vm190, %vm194
        %vm197 = vmand %vm191, %vm195
        %vm198 = vmor %vm185, %vm196
        %vm199 = vmor %vm186, %vm197
        %s200 = sld [smem:[#allocation4 + %s176]]
        %v201 = vstv %s200
        %vm202 = vcmp.ge.s32.totalorder %v175, %v201
        %s203 = sadd.s32 %s200, 10
        %v204 = vstv %s203
        %vm205 = vcmp.lt.s32.totalorder %v175, %v204
        %vm206 = vmand %vm202, %vm205
        %s207 = sld [smem:[#allocation4 + %s187]]
        %v208 = vstv %s207
        %vm209 = vcmp.ge.s32.totalorder %v175, %v208
        %s210 = sadd.s32 %s207, 10
        %v211 = vstv %s210
        %vm212 = vcmp.lt.s32.totalorder %v175, %v211
        %vm213 = vmand %vm209, %vm212
        %vm214 = vmor %vm206, %vm213
        %v215 = vld [vmem:[%s146] sm:$0xff]
        %v216 = vld [vmem:[%s146 + $0x8] sm:$0xff]
        %v217 = vsel %vm198, 1, 0
        %v218 = vsel %vm199, 1, 0
        %vm219 = vcmp.eq.s32.totalorder %v217, 1
        %vm220 = vcmp.eq.s32.totalorder %v218, 1
        %v221 = vsel %vm214, 1, 0
        %vm222 = vcmp.eq.s32.totalorder %v221, 1
        %vm223 = vmor %vm219, %vm222
        %vm224 = vmor %vm220, %vm222
        %v225 = vsel %vm223, 0.0, %v215
        %v226 = vsel %vm224, 0.0, %v216
        %227 = vst [vmem:[%s164] sm:$0xff] %v225
        %228 = vst [vmem:[%s164 + $0x8] sm:$0xff] %v226
        %s229 = sand.u32 %s80, 1
        %s230 = scalar_lea.sflag [#allocation7], %s229
        %s231 = sand.u32 %s80, 1
        %s232 = smul.addr %s231, 16
        %s233 = scalar_lea.vmem [#allocation8], %s232
        // Predicated region
        $region29: #{tpu_custom_call.1} parent=23 // pred_check
          %p234 = pneg %p90
        $region30: #{tpu_custom_call.1} parent=23 // pred_check_branch
          %236 = sbr.rel (%p234) target = $region32
        $region31: #{tpu_custom_call.1} parent=23 // pred_region
          %s237 = smul.u32 2, %s35
          %s239 = ssub.s32 256, 256
          %240 = vsyncadd %s230, %s239
          %s241 = smul.addr %s34, 8
          %s242 = sadd.s32 %s237, %s241
          %s243 = smul.addr %s242, 128
          %s244 = scalar_lea.hbm %s3, %s243
          %s245 = sshll.u32 %s233, 4
          %s246 = int_to_ptr.vmem [resolvable:$true] %s245
          %251 = dma.vmem_to_hbm [thread:$0]  %s246, 256, %s244, %s230, 128, 128, 8
        $region32: #{tpu_custom_call.1} parent=23 // pred_fallthru
          _
      $region24: #{tpu_custom_call.1} parent=5 // pred_fallthru
        _
      %p252 = scmp.le.s32.totalorder 2, %s25
      // Predicated region
      $region33: #{tpu_custom_call.1} parent=5 // pred_check
        %p253 = pneg %p252
      $region34: #{tpu_custom_call.1} parent=5 // pred_check_branch
        %255 = sbr.rel (%p253) target = $region36
      $region35: #{tpu_custom_call.1} parent=5 // pred_region
        %s256 = ssub.s32 %s25, 2
        // Predicated region
        $region37: #{tpu_custom_call.1} parent=35 // pred_check
          %p257 = pneg %p96
        $region38: #{tpu_custom_call.1} parent=35 // pred_check_branch
          %259 = sbr.rel (%p257) target = $region40
        $region39: #{tpu_custom_call.1} parent=35 // pred_region
          %s260 = sand.u32 %s81, 1
          %s261 = scalar_lea.sflag [#allocation7], %s260
          %s262 = sand.u32 %s81, 1
          %s263 = smul.addr %s262, 16
          %s264 = scalar_lea.vmem [#allocation8], %s263
          %265 = dma.done %s261, 256
        $region40: #{tpu_custom_call.1} parent=35 // pred_fallthru
          _
      $region36: #{tpu_custom_call.1} parent=5 // pred_fallthru
        _
    $region6: #{tpu_custom_call.1} parent=1 // loop_footer
      %s29 = sadd.s32 1, %s25
    $region7: #{tpu_custom_call.1} parent=1 // loop_footer_branch
      %24 = sbr.rel target = $region3
    $region8: #{tpu_custom_call.1} parent=1 // loop_exit
      _
    %266 = vsyncpa [#allocation6], 1
    %s267 = scalar_lea.sflag [#allocation6], 1
    %268 = vsyncpa %s267, 1
    %269 = vsyncpa [#allocation7], 1
    %s270 = scalar_lea.sflag [#allocation7], 1
    %271 = vsyncpa %s270, 1

</llo_original>
